<compile_context>
chip_gen: v5e
topology: v5e:2x2
jax: 0.10.0
libtpu: 0.0.40
codegen_flags: <defaults>
</compile_context>

<pallas_src>
import jax
import jax.numpy as jnp
from jax.experimental import pallas as pl
from jax.experimental.pallas import tpu as pltpu

WIN_SIZE = 11
WIN_SIGMA = 1.5
DATA_RANGE = 1.0
K1, K2 = 0.01, 0.03
C1 = (K1 * DATA_RANGE) ** 2
C2 = (K2 * DATA_RANGE) ** 2

# MXU operand dtype for the Gaussian-filter matmuls (accumulation stays f32).
FILTER_MATMUL_DTYPE = jnp.bfloat16

_VMEM_BUDGET_BYTES = 20 * 1024 * 1024   # per-step working-set target (v7x-safe)
_VMEM_LIMIT_BYTES = 48 * 1024 * 1024    # < v7x 64 MiB physical VMEM


def _combined_loss_kernel(x_ref, y_ref, ah_ref, awt_ref, out_ref):
    """One grid step: TB images -> lane-dense partial sums.

    x_ref, y_ref : (TB, H, W)   f32 image blocks
    ah_ref       : (Hout, H)    H-direction Gaussian band matrix
    awt_ref      : (W, Wout)    W-direction Gaussian band matrix (transposed)
    out_ref      : (1, 2, 128)  row 0 = sum of SSIM map, row 1 = SmoothL1 sum
    """
    x = x_ref[...].astype(jnp.float32)
    y = y_ref[...].astype(jnp.float32)
    awt = awt_ref[...]                      # (W, Wout)
    ah = ah_ref[...]                        # (Hout, H)
    mm_dtype = awt.dtype
    tb = x.shape[0]
    n5 = 5 * tb

    # ---------------- SmoothL1 (beta = 1.0): partial element sum ----------------
    d = x - y
    ad = jnp.abs(d)
    l1_sum = jnp.sum(jnp.where(ad < 1.0, 0.5 * d * d, ad - 0.5))

    # ---------------- Separable Gaussian filtering on the MXU -------------------
    # Stack the five maps along the batch axis so each filter direction is a
    # single batched matmul (batch = 5*TB) against the small band matrix.
    stacked = jnp.concatenate(
        [x.astype(mm_dtype),
         y.astype(mm_dtype),
         (x * x).astype(mm_dtype),
         (y * y).astype(mm_dtype),
         (x * y).astype(mm_dtype)],
        axis=0)                                                   # (5*TB, H, W)

    # W-direction (valid) filter: (5TB, H, W) @ (W, Wout) per batch element.
    awt_b = jnp.broadcast_to(awt, (n5,) + awt.shape)              # (5*TB, W, Wout)
    t = jnp.einsum('nhw,nwo->nho', stacked, awt_b,
                   preferred_element_type=jnp.float32)            # (5*TB, H, Wout)

    # H-direction (valid) filter: (Hout, H) @ (H, Wout) per batch element.
    ah_b = jnp.broadcast_to(ah, (n5,) + ah.shape)                 # (5*TB, Hout, H)
    f = jnp.einsum('noh,nhw->now', ah_b, t.astype(mm_dtype),
                   preferred_element_type=jnp.float32)            # (5*TB, Hout, Wout)

    mu1 = f[0 * tb:1 * tb]
    mu2 = f[1 * tb:2 * tb]
    exx = f[2 * tb:3 * tb]
    eyy = f[3 * tb:4 * tb]
    exy = f[4 * tb:5 * tb]

    mu1_sq = mu1 * mu1
    mu2_sq = mu2 * mu2
    mu1_mu2 = mu1 * mu2
    sigma1_sq = exx - mu1_sq
    sigma2_sq = eyy - mu2_sq
    sigma12 = exy - mu1_mu2

    # Single per-element division (one EUP pass) instead of two.
    num = (2.0 * mu1_mu2 + C1) * (2.0 * sigma12 + C2)
    den = (mu1_sq + mu2_sq + C1) * (sigma1_sq + sigma2_sq + C2)
    ssim_sum = jnp.sum(num / den)

    # Lane-dense (128-wide, unmasked) partial-sum store; reduced in the wrapper.
    out_ref[...] = jnp.concatenate(
        [jnp.full((1, 1, 128), ssim_sum, dtype=jnp.float32),
         jnp.full((1, 1, 128), l1_sum, dtype=jnp.float32)],
        axis=1)


def _gaussian_1d(size, sigma):
    coords = jnp.arange(size, dtype=jnp.float32) - size // 2
    g = jnp.exp(-(coords ** 2) / (2.0 * sigma ** 2))
    return g / jnp.sum(g)


def _band_matrix(out_len, in_len, g):
    # A[i, i + k] = g[k] for k in [0, WIN_SIZE)  -> valid cross-correlation.
    rows = jnp.arange(out_len)[:, None]
    cols = jnp.arange(in_len)[None, :]
    k = cols - rows
    valid = (k >= 0) & (k < WIN_SIZE)
    return jnp.where(valid, g[jnp.clip(k, 0, WIN_SIZE - 1)], 0.0).astype(jnp.float32)


def _choose_images_per_step(n_imgs, H, W, Hout, Wout, budget=_VMEM_BUDGET_BYTES):
    """Largest divisor of n_imgs whose per-step working set fits the VMEM budget."""
    def est_bytes(tb):
        inputs = 16 * tb * H * W                     # x, y f32, double-buffered
        stacked = 10 * tb * H * W                    # 5 maps, bf16
        t_stage = 30 * tb * H * Wout                 # t f32 + bf16 copy
        f_stage = 44 * tb * Hout * Wout              # filtered maps + SSIM temps
        bands = 10 * tb * (W * Wout + Hout * H)      # broadcast band matrices
        return inputs + stacked + t_stage + f_stage + bands + (1 << 20)

    divisors = [tb for tb in range(1, n_imgs + 1) if n_imgs % tb == 0]
    fitting = [tb for tb in divisors if est_bytes(tb) <= budget]
    return max(fitting) if fitting else 1


def combined_loss(img1, img2, alpha=0.8):
    """img1, img2: (B, C, H, W) arrays, values assumed in [0, data_range]."""
    B, C, H, W = img1.shape
    assert H >= WIN_SIZE and W >= WIN_SIZE, "SSIM requires spatial dims >= 11"
    n_imgs = B * C
    Hout = H - WIN_SIZE + 1
    Wout = W - WIN_SIZE + 1

    x3 = img1.reshape(n_imgs, H, W).astype(jnp.float32)
    y3 = img2.reshape(n_imgs, H, W).astype(jnp.float32)

    g = _gaussian_1d(WIN_SIZE, WIN_SIGMA)
    awt = _band_matrix(Wout, W, g).T.astype(FILTER_MATMUL_DTYPE)   # (W, Wout)
    ah = _band_matrix(Hout, H, g).astype(FILTER_MATMUL_DTYPE)      # (Hout, H)

    tb = _choose_images_per_step(n_imgs, H, W, Hout, Wout)
    n_steps = n_imgs // tb

    parts = pl.pallas_call(
        _combined_loss_kernel,
        out_shape=jax.ShapeDtypeStruct((n_steps, 2, 128), jnp.float32),
        grid_spec=pltpu.PrefetchScalarGridSpec(
            num_scalar_prefetch=0,
            grid=(n_steps,),
            in_specs=[
                pl.BlockSpec((tb, H, W), lambda i: (i, 0, 0)),
                pl.BlockSpec((tb, H, W), lambda i: (i, 0, 0)),
                pl.BlockSpec((Hout, H), lambda i: (0, 0)),
                pl.BlockSpec((W, Wout), lambda i: (0, 0)),
            ],
            out_specs=pl.BlockSpec((1, 2, 128), lambda i: (i, 0, 0)),
        ),
        compiler_params=pltpu.CompilerParams(
            # Per-step partial sums are independent -> this axis can be split
            # across TensorCores on multi-TC chips (v7x); harmless on v5e/v6e.
            dimension_semantics=("parallel",),
            vmem_limit_bytes=_VMEM_LIMIT_BYTES,
        ),
    )(x3, y3, ah, awt)

    # Final reductions + alpha combine in the wrapper (cheap, improves accuracy).
    ssim_mean = jnp.sum(parts[:, 0, 0]) / float(n_imgs * Hout * Wout)
    l1_mean = jnp.sum(parts[:, 1, 0]) / float(n_imgs * H * W)
    alpha = jnp.float32(alpha)
    return alpha * (1.0 - ssim_mean) + (1.0 - alpha) * l1_mean


def _reference_loss(img1, img2, alpha=0.8):
    """Pure-JAX (f32) reference of the same math, for a sanity check."""
    B, C, H, W = img1.shape
    n = B * C
    Hout, Wout = H - WIN_SIZE + 1, W - WIN_SIZE + 1
    x = img1.reshape(n, H, W).astype(jnp.float32)
    y = img2.reshape(n, H, W).astype(jnp.float32)
    g = _gaussian_1d(WIN_SIZE, WIN_SIGMA)
    ah = _band_matrix(Hout, H, g)
    aw = _band_matrix(Wout, W, g)

    def filt(z):
        return jnp.einsum('oh,nhw,pw->nop', ah, z, aw)

    mu1, mu2 = filt(x), filt(y)
    s1 = filt(x * x) - mu1 ** 2
    s2 = filt(y * y) - mu2 ** 2
    s12 = filt(x * y) - mu1 * mu2
    ssim_map = ((2 * mu1 * mu2 + C1) * (2 * s12 + C2)) / (
        (mu1 ** 2 + mu2 ** 2 + C1) * (s1 + s2 + C2))
    ssim = jnp.mean(ssim_map)
    d = x - y
    ad = jnp.abs(d)
    l1 = jnp.mean(jnp.where(ad < 1.0, 0.5 * d * d, ad - 0.5))
    return alpha * (1.0 - ssim) + (1.0 - alpha) * l1


if __name__ == "__main__":
    key = jax.random.PRNGKey(0)
    k1, k2 = jax.random.split(key)
    B, C, H, W = 2, 1, 32, 32
    img1 = jax.random.uniform(k1, (B, C, H, W), dtype=jnp.float32)
    img2 = jax.random.uniform(k2, (B, C, H, W), dtype=jnp.float32)

    loss = combined_loss(img1, img2, alpha=0.8)
    jax.block_until_ready(loss)

    ref = _reference_loss(img1, img2, alpha=0.8)
    jax.block_until_ready(ref)

    assert loss.shape == () and bool(jnp.isfinite(loss))
    # Loose tolerance: bf16 MXU operands perturb SSIM at the ~1e-3 level.
    assert float(jnp.abs(loss - ref)) < 5e-2
    print("KERNEL_OK")
</pallas_src>

<mosaic_0001>
module attributes {stable_mosaic.version = 11 : i64} {
  func.func @_combined_loss_kernel(%arg0: i32, %arg1: memref<2x32x32xf32, #tpu.memory_space<vmem>>, %arg2: memref<2x32x32xf32, #tpu.memory_space<vmem>>, %arg3: memref<22x32xbf16, #tpu.memory_space<vmem>>, %arg4: memref<32x22xbf16, #tpu.memory_space<vmem>>, %arg5: memref<1x2x128xf32, #tpu.memory_space<vmem>>) attributes {dimension_semantics = [#tpu.dimension_semantics<parallel>], iteration_bounds = array<i64: 1>, scalar_prefetch = 0 : i64, scratch_operands = 0 : i64, tpu.core_type = #tpu.core_type<tc>, window_params = [{transform_indices = @transform_0, window_bounds = array<i64: 2, 32, 32>}, {transform_indices = @transform_1, window_bounds = array<i64: 2, 32, 32>}, {pipeline_mode = #tpu.pipeline_mode<synchronous>, transform_indices = @transform_2, window_bounds = array<i64: 22, 32>}, {pipeline_mode = #tpu.pipeline_mode<synchronous>, transform_indices = @transform_3, window_bounds = array<i64: 32, 22>}, {transform_indices = @transform_4, window_bounds = array<i64: 1, 2, 128>}]} {
    %c0 = arith.constant 0 : index
    %c0_0 = arith.constant 0 : index
    %c0_1 = arith.constant 0 : index
    %0 = vector.load %arg1[%c0, %c0_0, %c0_1] : memref<2x32x32xf32, #tpu.memory_space<vmem>>, vector<2x32x32xf32>
    %c0_2 = arith.constant 0 : index
    %c0_3 = arith.constant 0 : index
    %c0_4 = arith.constant 0 : index
    %1 = vector.load %arg2[%c0_2, %c0_3, %c0_4] : memref<2x32x32xf32, #tpu.memory_space<vmem>>, vector<2x32x32xf32>
    %c0_5 = arith.constant 0 : index
    %c0_6 = arith.constant 0 : index
    %2 = vector.load %arg4[%c0_5, %c0_6] : memref<32x22xbf16, #tpu.memory_space<vmem>>, vector<32x22xbf16>
    %c0_7 = arith.constant 0 : index
    %c0_8 = arith.constant 0 : index
    %3 = vector.load %arg3[%c0_7, %c0_8] : memref<22x32xbf16, #tpu.memory_space<vmem>>, vector<22x32xbf16>
    %4 = arith.subf %0, %1 : vector<2x32x32xf32>
    %5 = math.absf %4 : vector<2x32x32xf32>
    %cst = arith.constant 1.000000e+00 : f32
    %6 = vector.broadcast %cst : f32 to vector<2x32x32xf32>
    %7 = arith.cmpf olt, %5, %6 : vector<2x32x32xf32>
    %cst_9 = arith.constant 5.000000e-01 : f32
    %8 = vector.broadcast %cst_9 : f32 to vector<2x32x32xf32>
    %9 = arith.mulf %8, %4 : vector<2x32x32xf32>
    %10 = arith.mulf %9, %4 : vector<2x32x32xf32>
    %cst_10 = arith.constant 5.000000e-01 : f32
    %11 = vector.broadcast %cst_10 : f32 to vector<2x32x32xf32>
    %12 = arith.subf %5, %11 : vector<2x32x32xf32>
    %13 = arith.select %7, %10, %12 : vector<2x32x32xi1>, vector<2x32x32xf32>
    %14 = vector.shape_cast %13 : vector<2x32x32xf32> to vector<1x2x32x32xf32>
    %cst_11 = arith.constant dense<0.000000e+00> : vector<1xf32>
    %15 = vector.multi_reduction <add>, %14, %cst_11 [1, 2, 3] : vector<1x2x32x32xf32> to vector<1xf32>
    %16 = vector.shape_cast %15 : vector<1xf32> to vector<1x1x1x1xf32>
    %17 = vector.extract %16[0, 0, 0, 0] : f32 from vector<1x1x1x1xf32>
    %18 = arith.truncf %0 : vector<2x32x32xf32> to vector<2x32x32xbf16>
    %19 = arith.truncf %1 : vector<2x32x32xf32> to vector<2x32x32xbf16>
    %20 = arith.mulf %0, %0 : vector<2x32x32xf32>
    %21 = arith.truncf %20 : vector<2x32x32xf32> to vector<2x32x32xbf16>
    %22 = arith.mulf %1, %1 : vector<2x32x32xf32>
    %23 = arith.truncf %22 : vector<2x32x32xf32> to vector<2x32x32xbf16>
    %24 = arith.mulf %0, %1 : vector<2x32x32xf32>
    %25 = arith.truncf %24 : vector<2x32x32xf32> to vector<2x32x32xbf16>
    %26 = tpu.concatenate %18, %19, %21, %23, %25 in 0 : vector<2x32x32xbf16>, vector<2x32x32xbf16>, vector<2x32x32xbf16>, vector<2x32x32xbf16>, vector<2x32x32xbf16> -> vector<10x32x32xbf16>
    %27 = vector.shape_cast %2 : vector<32x22xbf16> to vector<1x32x22xbf16>
    %28 = vector.broadcast %27 : vector<1x32x22xbf16> to vector<10x32x22xbf16>
    "tpu.trace_start"() <{level = 10 : i32, message = "nhw,nwo->nho"}> : () -> ()
    %cst_12 = arith.constant dense<0.000000e+00> : vector<10x32x22xf32>
    %29 = tpu.matmul %26, %28, %cst_12 {dimension_numbers = #tpu.dot_dimension_numbers<[2], [1], [1], [2], [0, 0, 0, 1, 1, 2], [0], [0]>} : vector<10x32x32xbf16>, vector<10x32x22xbf16>, vector<10x32x22xf32> -> vector<10x32x22xf32>
    "tpu.trace_stop"() : () -> ()
    %30 = vector.shape_cast %3 : vector<22x32xbf16> to vector<1x22x32xbf16>
    %31 = vector.broadcast %30 : vector<1x22x32xbf16> to vector<10x22x32xbf16>
    %32 = arith.truncf %29 : vector<10x32x22xf32> to vector<10x32x22xbf16>
    "tpu.trace_start"() <{level = 10 : i32, message = "noh,nhw->now"}> : () -> ()
    %cst_13 = arith.constant dense<0.000000e+00> : vector<10x22x22xf32>
    %33 = tpu.matmul %31, %32, %cst_13 {dimension_numbers = #tpu.dot_dimension_numbers<[2], [1], [1], [2], [0, 0, 0, 1, 1, 2], [0], [0]>} : vector<10x22x32xbf16>, vector<10x32x22xbf16>, vector<10x22x22xf32> -> vector<10x22x22xf32>
    "tpu.trace_stop"() : () -> ()
    %34 = vector.extract_strided_slice %33 {offsets = [0, 0, 0], sizes = [2, 22, 22], strides = [1, 1, 1]} : vector<10x22x22xf32> to vector<2x22x22xf32>
    %35 = vector.extract_strided_slice %33 {offsets = [2, 0, 0], sizes = [2, 22, 22], strides = [1, 1, 1]} : vector<10x22x22xf32> to vector<2x22x22xf32>
    %36 = vector.extract_strided_slice %33 {offsets = [4, 0, 0], sizes = [2, 22, 22], strides = [1, 1, 1]} : vector<10x22x22xf32> to vector<2x22x22xf32>
    %37 = vector.extract_strided_slice %33 {offsets = [6, 0, 0], sizes = [2, 22, 22], strides = [1, 1, 1]} : vector<10x22x22xf32> to vector<2x22x22xf32>
    %38 = vector.extract_strided_slice %33 {offsets = [8, 0, 0], sizes = [2, 22, 22], strides = [1, 1, 1]} : vector<10x22x22xf32> to vector<2x22x22xf32>
    %39 = arith.mulf %34, %34 : vector<2x22x22xf32>
    %40 = arith.mulf %35, %35 : vector<2x22x22xf32>
    %41 = arith.mulf %34, %35 : vector<2x22x22xf32>
    %42 = arith.subf %36, %39 : vector<2x22x22xf32>
    %43 = arith.subf %37, %40 : vector<2x22x22xf32>
    %44 = arith.subf %38, %41 : vector<2x22x22xf32>
    %cst_14 = arith.constant 2.000000e+00 : f32
    %45 = vector.broadcast %cst_14 : f32 to vector<2x22x22xf32>
    %46 = arith.mulf %45, %41 : vector<2x22x22xf32>
    %cst_15 = arith.constant 9.99999974E-5 : f32
    %47 = vector.broadcast %cst_15 : f32 to vector<2x22x22xf32>
    %48 = arith.addf %46, %47 : vector<2x22x22xf32>
    %cst_16 = arith.constant 2.000000e+00 : f32
    %49 = vector.broadcast %cst_16 : f32 to vector<2x22x22xf32>
    %50 = arith.mulf %49, %44 : vector<2x22x22xf32>
    %cst_17 = arith.constant 8.99999984E-4 : f32
    %51 = vector.broadcast %cst_17 : f32 to vector<2x22x22xf32>
    %52 = arith.addf %50, %51 : vector<2x22x22xf32>
    %53 = arith.mulf %48, %52 : vector<2x22x22xf32>
    %54 = arith.addf %39, %40 : vector<2x22x22xf32>
    %cst_18 = arith.constant 9.99999974E-5 : f32
    %55 = vector.broadcast %cst_18 : f32 to vector<2x22x22xf32>
    %56 = arith.addf %54, %55 : vector<2x22x22xf32>
    %57 = arith.addf %42, %43 : vector<2x22x22xf32>
    %cst_19 = arith.constant 8.99999984E-4 : f32
    %58 = vector.broadcast %cst_19 : f32 to vector<2x22x22xf32>
    %59 = arith.addf %57, %58 : vector<2x22x22xf32>
    %60 = arith.mulf %56, %59 : vector<2x22x22xf32>
    %61 = arith.divf %53, %60 : vector<2x22x22xf32>
    %62 = vector.shape_cast %61 : vector<2x22x22xf32> to vector<1x2x22x22xf32>
    %cst_20 = arith.constant dense<0.000000e+00> : vector<1xf32>
    %63 = vector.multi_reduction <add>, %62, %cst_20 [1, 2, 3] : vector<1x2x22x22xf32> to vector<1xf32>
    %64 = vector.shape_cast %63 : vector<1xf32> to vector<1x1x1x1xf32>
    %65 = vector.extract %64[0, 0, 0, 0] : f32 from vector<1x1x1x1xf32>
    %66 = vector.broadcast %65 : f32 to vector<1x1x128xf32>
    %67 = vector.broadcast %17 : f32 to vector<1x1x128xf32>
    %68 = tpu.concatenate %66, %67 in 1 : vector<1x1x128xf32>, vector<1x1x128xf32> -> vector<1x2x128xf32>
    %c0_21 = arith.constant 0 : index
    %c0_22 = arith.constant 0 : index
    %c0_23 = arith.constant 0 : index
    %69 = vector.load %arg5[%c0_21, %c0_22, %c0_23] : memref<1x2x128xf32, #tpu.memory_space<vmem>>, vector<1x2x128xf32>
    tpu.vector_store %arg5[%c0_21, %c0_22, %c0_23], %68 {strides = array<i32>} : memref<1x2x128xf32, #tpu.memory_space<vmem>>, vector<1x2x128xf32>,
    return
  }
  func.func @transform_0(%arg0: i32) -> (i32, i32, i32) {
    %c0_i32 = arith.constant 0 : i32
    %c0_i32_0 = arith.constant 0 : i32
    %c0_i32_1 = arith.constant 0 : i32
    return %arg0, %c0_i32, %c0_i32_0 : i32, i32, i32
  }
  func.func @transform_1(%arg0: i32) -> (i32, i32, i32) {
    %c0_i32 = arith.constant 0 : i32
    %c0_i32_0 = arith.constant 0 : i32
    %c0_i32_1 = arith.constant 0 : i32
    return %arg0, %c0_i32, %c0_i32_0 : i32, i32, i32
  }
  func.func @transform_2(%arg0: i32) -> (i32, i32) {
    %c0_i32 = arith.constant 0 : i32
    %c0_i32_0 = arith.constant 0 : i32
    %c0_i32_1 = arith.constant 0 : i32
    return %c0_i32, %c0_i32_0 : i32, i32
  }
  func.func @transform_3(%arg0: i32) -> (i32, i32) {
    %c0_i32 = arith.constant 0 : i32
    %c0_i32_0 = arith.constant 0 : i32
    %c0_i32_1 = arith.constant 0 : i32
    return %c0_i32, %c0_i32_0 : i32, i32
  }
  func.func @transform_4(%arg0: i32) -> (i32, i32, i32) {
    %c0_i32 = arith.constant 0 : i32
    %c0_i32_0 = arith.constant 0 : i32
    %c0_i32_1 = arith.constant 0 : i32
    return %arg0, %c0_i32, %c0_i32_0 : i32, i32, i32
  }
}

</mosaic_0001>

<llo_original>
// kernel: tpu_custom_call.1
$region0: #{tpu_custom_call.1}
  #allocation0 [shape = 'u32[]', space=smem, size = 0x4, offset = 0x4, fixed_abs, tag = 'smem constant byte address 0x4 - core index']
  #allocation1 [shape = 'u32[72,128]{1,0:T(1,128)}', space=vmem, size = 0x9000, scoped, tag = 'internal scratch']
  %s0 = inlined_call_operand.hbm [shape: f32[2,32,32], index: 0, kind: input, shape index: {}]
  %s1 = inlined_call_operand.hbm [shape: f32[2,32,32], index: 1, kind: input, shape index: {}]
  %s2 = inlined_call_operand.vmem [shape: bf16[22,32], index: 2, kind: input, shape index: {}]
  %s3 = inlined_call_operand.vmem [shape: bf16[32,22], index: 3, kind: input, shape index: {}]
  %s4 = inlined_call_operand.hbm [shape: f32[1,2,128], index: 4, kind: output, shape index: {}]
  %s5 = sld [smem:[#allocation0]]
  $region34: #{tpu_custom_call.1} parent=0
    _
  %s7 = ssub.s32 1, %s5
  %s8 = scalar_select 0, %s7, %s5
  $region1: #{tpu_custom_call.1} parent=0
    #allocation2 [shape = 'u8[32768]{0}', space=vmem, size = 0x8000, scoped, tag = 'input window, operand 0, single buffered']
    #allocation3 [shape = 's32[1]{0}', space=sflag, size = 0x4, scoped, tag = 'scoped memory for tpu_custom_call.1']
    #allocation4 [shape = 's32[1]{0}', space=sflag, size = 0x4, scoped, tag = 'scoped memory for tpu_custom_call.1']
    #allocation5 [shape = 'u8[32768]{0}', space=vmem, size = 0x8000, scoped, tag = 'input window, operand 1, single buffered']
    #allocation6 [shape = 's32[1]{0}', space=sflag, size = 0x4, scoped, tag = 'scoped memory for tpu_custom_call.1']
    #allocation7 [shape = 'u8[1024]{0}', space=vmem, size = 0x400, scoped, tag = 'output window, operand 0, single buffered']
    %9 = vsyncpa [#allocation3], 0
    %10 = vsyncpa [#allocation6], 0
    %11 = vsyncpa [#allocation4], 0
    // Predicated region
    $region2: #{tpu_custom_call.1} parent=1 // pred_check
      _
    $region3: #{tpu_custom_call.1} parent=1 // pred_check_branch
      %13 = sbr.rel (0) target = $region5
    $region4: #{tpu_custom_call.1} parent=1 // pred_region
      %15 = vsyncadd [#allocation3], 0
      %s16 = sshll.u32 %s0, 4
      %s17 = int_to_ptr.hbm [resolvable:$true] %s16
      %s18 = sshll.u32 [#allocation2], 4
      %s19 = int_to_ptr.vmem [resolvable:$true] %s18
      %24 = dma.hbm_to_vmem [thread:$0]  %s17, 1024, %s19, [#allocation3], 128, 128, 8
    $region5: #{tpu_custom_call.1} parent=1 // pred_fallthru
      _
    // Predicated region
    $region6: #{tpu_custom_call.1} parent=1 // pred_check
      _
    $region7: #{tpu_custom_call.1} parent=1 // pred_check_branch
      %26 = sbr.rel (0) target = $region9
    $region8: #{tpu_custom_call.1} parent=1 // pred_region
      %28 = vsyncadd [#allocation6], 0
      %s29 = sshll.u32 %s1, 4
      %s30 = int_to_ptr.hbm [resolvable:$true] %s29
      %s31 = sshll.u32 [#allocation5], 4
      %s32 = int_to_ptr.vmem [resolvable:$true] %s31
      %37 = dma.hbm_to_vmem [thread:$0]  %s30, 1024, %s32, [#allocation6], 128, 128, 8
    $region9: #{tpu_custom_call.1} parent=1 // pred_fallthru
      _
    // Predicated region
    $region10: #{tpu_custom_call.1} parent=1 // pred_check
      _
    $region11: #{tpu_custom_call.1} parent=1 // pred_check_branch
      %39 = sbr.rel (0) target = $region13
    $region12: #{tpu_custom_call.1} parent=1 // pred_region
      _
    $region13: #{tpu_custom_call.1} parent=1 // pred_fallthru
      _
    // Predicated region
    $region14: #{tpu_custom_call.1} parent=1 // pred_check
      _
    $region15: #{tpu_custom_call.1} parent=1 // pred_check_branch
      %41 = sbr.rel (0) target = $region17
    $region16: #{tpu_custom_call.1} parent=1 // pred_region
      _
    $region17: #{tpu_custom_call.1} parent=1 // pred_fallthru
      _
    // Predicated region
    $region18: #{tpu_custom_call.1} parent=1 // pred_check
      _
    $region19: #{tpu_custom_call.1} parent=1 // pred_check_branch
      %43 = sbr.rel (0) target = $region21
    $region20: #{tpu_custom_call.1} parent=1 // pred_region
      %45 = dma.done [#allocation3], 1024
    $region21: #{tpu_custom_call.1} parent=1 // pred_fallthru
      _
    // Predicated region
    $region22: #{tpu_custom_call.1} parent=1 // pred_check
      _
    $region23: #{tpu_custom_call.1} parent=1 // pred_check_branch
      %47 = sbr.rel (0) target = $region25
    $region24: #{tpu_custom_call.1} parent=1 // pred_region
      %49 = dma.done [#allocation6], 1024
    $region25: #{tpu_custom_call.1} parent=1 // pred_fallthru
      _
    %v51 = vld [vmem:[#allocation2] sm:$0xff]
    %v52 = vld [vmem:[#allocation2 + $0x8] sm:$0xff]
    %v53 = vld [vmem:[#allocation2 + $0x10] sm:$0xff]
    %v54 = vld [vmem:[#allocation2 + $0x18] sm:$0xff]
    %v55 = vld [vmem:[#allocation2 + $0x20] sm:$0xff]
    %v56 = vld [vmem:[#allocation2 + $0x28] sm:$0xff]
    %v57 = vld [vmem:[#allocation2 + $0x30] sm:$0xff]
    %v58 = vld [vmem:[#allocation2 + $0x38] sm:$0xff]
    %v59 = vld [vmem:[#allocation5] sm:$0xff]
    %v60 = vld [vmem:[#allocation5 + $0x8] sm:$0xff]
    %v61 = vld [vmem:[#allocation5 + $0x10] sm:$0xff]
    %v62 = vld [vmem:[#allocation5 + $0x18] sm:$0xff]
    %v63 = vld [vmem:[#allocation5 + $0x20] sm:$0xff]
    %v64 = vld [vmem:[#allocation5 + $0x28] sm:$0xff]
    %v65 = vld [vmem:[#allocation5 + $0x30] sm:$0xff]
    %v66 = vld [vmem:[#allocation5 + $0x38] sm:$0xff]
    %v67 = vld [vmem:[%s3] sm:$0xf]
    %v68 = vld [vmem:[%s3 + $0x4] sm:$0xf]
    %v69 = vld [vmem:[%s3 + $0x8] sm:$0xf]
    %v70 = vld [vmem:[%s3 + $0xc] sm:$0xf]
    %v71 = vld [vmem:[%s2] sm:$0xf]
    %v72 = vld [vmem:[%s2 + $0x4] sm:$0xf]
    %v73 = vld [vmem:[%s2 + $0x8] sm:$0x7]
    %v74 = vsub.f32 %v51, %v59
    %v75 = vsub.f32 %v52, %v60
    %v76 = vsub.f32 %v53, %v61
    %v77 = vsub.f32 %v54, %v62
    %v78 = vsub.f32 %v55, %v63
    %v79 = vsub.f32 %v56, %v64
    %v80 = vsub.f32 %v57, %v65
    %v81 = vsub.f32 %v58, %v66
    %v82 = vand.u32 2147483647, %v74
    %v83 = vand.u32 2147483647, %v75
    %v84 = vand.u32 2147483647, %v76
    %v85 = vand.u32 2147483647, %v77
    %v86 = vand.u32 2147483647, %v78
    %v87 = vand.u32 2147483647, %v79
    %v88 = vand.u32 2147483647, %v80
    %v89 = vand.u32 2147483647, %v81
    %vm90 = vcmp.lt.f32.partialorder %v82, 1.0
    %vm91 = vcmp.lt.f32.partialorder %v83, 1.0
    %vm92 = vcmp.lt.f32.partialorder %v84, 1.0
    %vm93 = vcmp.lt.f32.partialorder %v85, 1.0
    %vm94 = vcmp.lt.f32.partialorder %v86, 1.0
    %vm95 = vcmp.lt.f32.partialorder %v87, 1.0
    %vm96 = vcmp.lt.f32.partialorder %v88, 1.0
    %vm97 = vcmp.lt.f32.partialorder %v89, 1.0
    %v98 = vmul.f32 %v74, 0.5
    %v99 = vmul.f32 %v75, 0.5
    %v100 = vmul.f32 %v76, 0.5
    %v101 = vmul.f32 %v77, 0.5
    %v102 = vmul.f32 %v78, 0.5
    %v103 = vmul.f32 %v79, 0.5
    %v104 = vmul.f32 %v80, 0.5
    %v105 = vmul.f32 %v81, 0.5
    %v106 = vmul.f32 %v98, %v74
    %v107 = vmul.f32 %v99, %v75
    %v108 = vmul.f32 %v100, %v76
    %v109 = vmul.f32 %v101, %v77
    %v110 = vmul.f32 %v102, %v78
    %v111 = vmul.f32 %v103, %v79
    %v112 = vmul.f32 %v104, %v80
    %v113 = vmul.f32 %v105, %v81
    %v114 = vsub.f32 %v82, 0.5
    %v115 = vsub.f32 %v83, 0.5
    %v116 = vsub.f32 %v84, 0.5
    %v117 = vsub.f32 %v85, 0.5
    %v118 = vsub.f32 %v86, 0.5
    %v119 = vsub.f32 %v87, 0.5
    %v120 = vsub.f32 %v88, 0.5
    %v121 = vsub.f32 %v89, 0.5
    %v122 = vsel %vm90, %v106, %v114
    %v123 = vsel %vm91, %v107, %v115
    %v124 = vsel %vm92, %v108, %v116
    %v125 = vsel %vm93, %v109, %v117
    %v126 = vsel %vm94, %v110, %v118
    %v127 = vsel %vm95, %v111, %v119
    %v128 = vsel %vm96, %v112, %v120
    %v129 = vsel %vm97, %v113, %v121
    %vm130 = vcmask 261120
    %v131 = vsel %vm130, %v122, 0.0
    %v132 = vsel %vm130, %v123, 0.0
    %v133 = vadd.f32 %v131, %v132
    %v134 = vsel %vm130, %v124, 0.0
    %v135 = vadd.f32 %v133, %v134
    %v136 = vsel %vm130, %v125, 0.0
    %v137 = vadd.f32 %v135, %v136
    %v138 = vsel %vm130, %v126, 0.0
    %v139 = vadd.f32 %v137, %v138
    %v140 = vsel %vm130, %v127, 0.0
    %v141 = vadd.f32 %v139, %v140
    %v142 = vsel %vm130, %v128, 0.0
    %v143 = vadd.f32 %v141, %v142
    %v144 = vsel %vm130, %v129, 0.0
    %v145 = vadd.f32 %v143, %v144
    %146 = vadd.xlane.f32.xlu0 %v145
    %v147 = vpop.xlane.xlu0 %146
    %v148 = vrot.slane %v147, 4
    %v149 = vadd.f32 %v147, %v148
    %v150 = vrot.slane %v149, 2
    %v151 = vadd.f32 %v149, %v150
    %v152 = vrot.slane %v151, 1
    %v153 = vadd.f32 %v151, %v152
    %s154 = vtos %v153
    %v155 = vpack.c.bf16 %v51, %v51
    %v156 = vpack.c.bf16 %v52, %v52
    %v157 = vpack.c.bf16 %v53, %v53
    %v158 = vpack.c.bf16 %v54, %v54
    %v159 = vpack.c.bf16 %v55, %v55
    %v160 = vpack.c.bf16 %v56, %v56
    %v161 = vpack.c.bf16 %v57, %v57
    %v162 = vpack.c.bf16 %v58, %v58
    %v163 = vpack.c.bf16 %v59, %v59
    %v164 = vpack.c.bf16 %v60, %v60
    %v165 = vpack.c.bf16 %v61, %v61
    %v166 = vpack.c.bf16 %v62, %v62
    %v167 = vpack.c.bf16 %v63, %v63
    %v168 = vpack.c.bf16 %v64, %v64
    %v169 = vpack.c.bf16 %v65, %v65
    %v170 = vpack.c.bf16 %v66, %v66
    %v171 = vmul.f32 %v51, %v51
    %v172 = vmul.f32 %v52, %v52
    %v173 = vmul.f32 %v53, %v53
    %v174 = vmul.f32 %v54, %v54
    %v175 = vmul.f32 %v55, %v55
    %v176 = vmul.f32 %v56, %v56
    %v177 = vmul.f32 %v57, %v57
    %v178 = vmul.f32 %v58, %v58
    %v179 = vpack.c.bf16 %v171, %v171
    %v180 = vpack.c.bf16 %v172, %v172
    %v181 = vpack.c.bf16 %v173, %v173
    %v182 = vpack.c.bf16 %v174, %v174
    %v183 = vpack.c.bf16 %v175, %v175
    %v184 = vpack.c.bf16 %v176, %v176
    %v185 = vpack.c.bf16 %v177, %v177
    %v186 = vpack.c.bf16 %v178, %v178
    %v187 = vmul.f32 %v59, %v59
    %v188 = vmul.f32 %v60, %v60
    %v189 = vmul.f32 %v61, %v61
    %v190 = vmul.f32 %v62, %v62
    %v191 = vmul.f32 %v63, %v63
    %v192 = vmul.f32 %v64, %v64
    %v193 = vmul.f32 %v65, %v65
    %v194 = vmul.f32 %v66, %v66
    %v195 = vpack.c.bf16 %v187, %v187
    %v196 = vpack.c.bf16 %v188, %v188
    %v197 = vpack.c.bf16 %v189, %v189
    %v198 = vpack.c.bf16 %v190, %v190
    %v199 = vpack.c.bf16 %v191, %v191
    %v200 = vpack.c.bf16 %v192, %v192
    %v201 = vpack.c.bf16 %v193, %v193
    %v202 = vpack.c.bf16 %v194, %v194
    %v203 = vmul.f32 %v51, %v59
    %v204 = vmul.f32 %v52, %v60
    %v205 = vmul.f32 %v53, %v61
    %v206 = vmul.f32 %v54, %v62
    %v207 = vmul.f32 %v55, %v63
    %v208 = vmul.f32 %v56, %v64
    %v209 = vmul.f32 %v57, %v65
    %v210 = vmul.f32 %v58, %v66
    %v211 = vpack.c.bf16 %v203, %v203
    %v212 = vpack.c.bf16 %v204, %v204
    %v213 = vpack.c.bf16 %v205, %v205
    %v214 = vpack.c.bf16 %v206, %v206
    %v215 = vpack.c.bf16 %v207, %v207
    %v216 = vpack.c.bf16 %v208, %v208
    %v217 = vpack.c.bf16 %v209, %v209
    %v218 = vpack.c.bf16 %v210, %v210
    %v223 = vunpack.c.l.b16 %v155
    %v224 = vunpack.c.l.b16 %v156
    %v225 = vunpack.c.l.b16 %v157
    %v226 = vunpack.c.l.b16 %v158
    %v227 = vpack.c.b16 %v224, %v223
    %v228 = vpack.c.b16 %v226, %v225
    %v233 = vunpack.c.l.b16 %v67
    %v234 = vunpack.c.l.b16 %v68
    %v235 = vunpack.c.l.b16 %v69
    %v236 = vunpack.c.l.b16 %v70
    %v237 = vpack.c.b16 %v234, %v233
    %v238 = vpack.c.b16 %v236, %v235
    %v242 = vsel %vm130, %v227, 0
    %v245 = vsel %vm130, %v228, 0
    %247 = vmatpush.bf16.msra.mxu0 0
    %248 = vmatpush.bf16.msra.mxu0 0
    %249 = vmatpush.bf16.msra.mxu0 0
    %250 = vmatpush.bf16.msra.mxu0 0
    %251 = vmatpush.bf16.msra.mxu0 0
    %252 = vmatpush.bf16.msra.mxu0 0
    %253 = vmatpush.bf16.msra.mxu0 %v238
    %254 = vmatpush.bf16.msra.mxu0 %v237
    %255 = vmatmul.bf16.gmra.mxu0 %v242
    %v256 = vpop.f32.mrf.mxu0
    %v257 = vadd.f32 0.0, %v256
    %v258 = vpop.f32.mrf.mxu0
    %v259 = vadd.f32 0.0, %v258
    %260 = vmatmul.bf16.gmra.mxu0 %v245
    %v261 = vpop.f32.mrf.mxu0
    %v262 = vadd.f32 0.0, %v261
    %v263 = vpop.f32.mrf.mxu0
    %v264 = vadd.f32 0.0, %v263
    %265 = vdwg.mxu0
    %v270 = vunpack.c.l.b16 %v159
    %v271 = vunpack.c.l.b16 %v160
    %v272 = vunpack.c.l.b16 %v161
    %v273 = vunpack.c.l.b16 %v162
    %v274 = vpack.c.b16 %v271, %v270
    %v275 = vpack.c.b16 %v273, %v272
    %v277 = vsel %vm130, %v274, 0
    %v280 = vsel %vm130, %v275, 0
    %282 = vmatpush.bf16.msra.mxu0 0
    %283 = vmatpush.bf16.msra.mxu0 0
    %284 = vmatpush.bf16.msra.mxu0 0
    %285 = vmatpush.bf16.msra.mxu0 0
    %286 = vmatpush.bf16.msra.mxu0 0
    %287 = vmatpush.bf16.msra.mxu0 0
    %288 = vmatpush.bf16.msra.mxu0 %v238
    %289 = vmatpush.bf16.msra.mxu0 %v237
    %290 = vmatmul.bf16.gmra.mxu0 %v277
    %v291 = vpop.f32.mrf.mxu0
    %v292 = vadd.f32 0.0, %v291
    %v293 = vpop.f32.mrf.mxu0
    %v294 = vadd.f32 0.0, %v293
    %295 = vmatmul.bf16.gmra.mxu0 %v280
    %v296 = vpop.f32.mrf.mxu0
    %v297 = vadd.f32 0.0, %v296
    %v298 = vpop.f32.mrf.mxu0
    %v299 = vadd.f32 0.0, %v298
    %300 = vdwg.mxu0
    %v305 = vunpack.c.l.b16 %v163
    %v306 = vunpack.c.l.b16 %v164
    %v307 = vunpack.c.l.b16 %v165
    %v308 = vunpack.c.l.b16 %v166
    %v309 = vpack.c.b16 %v306, %v305
    %v310 = vpack.c.b16 %v308, %v307
    %v312 = vsel %vm130, %v309, 0
    %v315 = vsel %vm130, %v310, 0
    %317 = vmatpush.bf16.msra.mxu0 0
    %318 = vmatpush.bf16.msra.mxu0 0
    %319 = vmatpush.bf16.msra.mxu0 0
    %320 = vmatpush.bf16.msra.mxu0 0
    %321 = vmatpush.bf16.msra.mxu0 0
    %322 = vmatpush.bf16.msra.mxu0 0
    %323 = vmatpush.bf16.msra.mxu0 %v238
    %324 = vmatpush.bf16.msra.mxu0 %v237
    %325 = vmatmul.bf16.gmra.mxu0 %v312
    %v326 = vpop.f32.mrf.mxu0
    %v327 = vadd.f32 0.0, %v326
    %v328 = vpop.f32.mrf.mxu0
    %v329 = vadd.f32 0.0, %v328
    %330 = vmatmul.bf16.gmra.mxu0 %v315
    %v331 = vpop.f32.mrf.mxu0
    %v332 = vadd.f32 0.0, %v331
    %v333 = vpop.f32.mrf.mxu0
    %v334 = vadd.f32 0.0, %v333
    %335 = vdwg.mxu0
    %v340 = vunpack.c.l.b16 %v167
    %v341 = vunpack.c.l.b16 %v168
    %v342 = vunpack.c.l.b16 %v169
    %v343 = vunpack.c.l.b16 %v170
    %v344 = vpack.c.b16 %v341, %v340
    %v345 = vpack.c.b16 %v343, %v342
    %v347 = vsel %vm130, %v344, 0
    %v350 = vsel %vm130, %v345, 0
    %352 = vmatpush.bf16.msra.mxu0 0
    %353 = vmatpush.bf16.msra.mxu0 0
    %354 = vmatpush.bf16.msra.mxu0 0
    %355 = vmatpush.bf16.msra.mxu0 0
    %356 = vmatpush.bf16.msra.mxu0 0
    %357 = vmatpush.bf16.msra.mxu0 0
    %358 = vmatpush.bf16.msra.mxu0 %v238
    %359 = vmatpush.bf16.msra.mxu0 %v237
    %360 = vmatmul.bf16.gmra.mxu0 %v347
    %v361 = vpop.f32.mrf.mxu0
    %v362 = vadd.f32 0.0, %v361
    %v363 = vpop.f32.mrf.mxu0
    %v364 = vadd.f32 0.0, %v363
    %365 = vmatmul.bf16.gmra.mxu0 %v350
    %v366 = vpop.f32.mrf.mxu0
    %v367 = vadd.f32 0.0, %v366
    %v368 = vpop.f32.mrf.mxu0
    %v369 = vadd.f32 0.0, %v368
    %370 = vdwg.mxu0
    %v375 = vunpack.c.l.b16 %v179
    %v376 = vunpack.c.l.b16 %v180
    %v377 = vunpack.c.l.b16 %v181
    %v378 = vunpack.c.l.b16 %v182
    %v379 = vpack.c.b16 %v376, %v375
    %v380 = vpack.c.b16 %v378, %v377
    %v382 = vsel %vm130, %v379, 0
    %v385 = vsel %vm130, %v380, 0
    %387 = vmatpush.bf16.msra.mxu0 0
    %388 = vmatpush.bf16.msra.mxu0 0
    %389 = vmatpush.bf16.msra.mxu0 0
    %390 = vmatpush.bf16.msra.mxu0 0
    %391 = vmatpush.bf16.msra.mxu0 0
    %392 = vmatpush.bf16.msra.mxu0 0
    %393 = vmatpush.bf16.msra.mxu0 %v238
    %394 = vmatpush.bf16.msra.mxu0 %v237
    %395 = vmatmul.bf16.gmra.mxu0 %v382
    %v396 = vpop.f32.mrf.mxu0
    %v397 = vadd.f32 0.0, %v396
    %v398 = vpop.f32.mrf.mxu0
    %v399 = vadd.f32 0.0, %v398
    %400 = vmatmul.bf16.gmra.mxu0 %v385
    %v401 = vpop.f32.mrf.mxu0
    %v402 = vadd.f32 0.0, %v401
    %v403 = vpop.f32.mrf.mxu0
    %v404 = vadd.f32 0.0, %v403
    %405 = vdwg.mxu0
    %v410 = vunpack.c.l.b16 %v183
    %v411 = vunpack.c.l.b16 %v184
    %v412 = vunpack.c.l.b16 %v185
    %v413 = vunpack.c.l.b16 %v186
    %v414 = vpack.c.b16 %v411, %v410
    %v415 = vpack.c.b16 %v413, %v412
    %v417 = vsel %vm130, %v414, 0
    %v420 = vsel %vm130, %v415, 0
    %422 = vmatpush.bf16.msra.mxu0 0
    %423 = vmatpush.bf16.msra.mxu0 0
    %424 = vmatpush.bf16.msra.mxu0 0
    %425 = vmatpush.bf16.msra.mxu0 0
    %426 = vmatpush.bf16.msra.mxu0 0
    %427 = vmatpush.bf16.msra.mxu0 0
    %428 = vmatpush.bf16.msra.mxu0 %v238
    %429 = vmatpush.bf16.msra.mxu0 %v237
    %430 = vmatmul.bf16.gmra.mxu0 %v417
    %v431 = vpop.f32.mrf.mxu0
    %v432 = vadd.f32 0.0, %v431
    %v433 = vpop.f32.mrf.mxu0
    %v434 = vadd.f32 0.0, %v433
    %435 = vmatmul.bf16.gmra.mxu0 %v420
    %v436 = vpop.f32.mrf.mxu0
    %v437 = vadd.f32 0.0, %v436
    %v438 = vpop.f32.mrf.mxu0
    %v439 = vadd.f32 0.0, %v438
    %440 = vdwg.mxu0
    %v445 = vunpack.c.l.b16 %v195
    %v446 = vunpack.c.l.b16 %v196
    %v447 = vunpack.c.l.b16 %v197
    %v448 = vunpack.c.l.b16 %v198
    %v449 = vpack.c.b16 %v446, %v445
    %v450 = vpack.c.b16 %v448, %v447
    %v452 = vsel %vm130, %v449, 0
    %v455 = vsel %vm130, %v450, 0
    %457 = vmatpush.bf16.msra.mxu0 0
    %458 = vmatpush.bf16.msra.mxu0 0
    %459 = vmatpush.bf16.msra.mxu0 0
    %460 = vmatpush.bf16.msra.mxu0 0
    %461 = vmatpush.bf16.msra.mxu0 0
    %462 = vmatpush.bf16.msra.mxu0 0
    %463 = vmatpush.bf16.msra.mxu0 %v238
    %464 = vmatpush.bf16.msra.mxu0 %v237
    %465 = vmatmul.bf16.gmra.mxu0 %v452
    %v466 = vpop.f32.mrf.mxu0
    %v467 = vadd.f32 0.0, %v466
    %v468 = vpop.f32.mrf.mxu0
    %v469 = vadd.f32 0.0, %v468
    %470 = vmatmul.bf16.gmra.mxu0 %v455
    %v471 = vpop.f32.mrf.mxu0
    %v472 = vadd.f32 0.0, %v471
    %v473 = vpop.f32.mrf.mxu0
    %v474 = vadd.f32 0.0, %v473
    %475 = vdwg.mxu0
    %v480 = vunpack.c.l.b16 %v199
    %v481 = vunpack.c.l.b16 %v200
    %v482 = vunpack.c.l.b16 %v201
    %v483 = vunpack.c.l.b16 %v202
    %v484 = vpack.c.b16 %v481, %v480
    %v485 = vpack.c.b16 %v483, %v482
    %v487 = vsel %vm130, %v484, 0
    %v490 = vsel %vm130, %v485, 0
    %492 = vmatpush.bf16.msra.mxu0 0
    %493 = vmatpush.bf16.msra.mxu0 0
    %494 = vmatpush.bf16.msra.mxu0 0
    %495 = vmatpush.bf16.msra.mxu0 0
    %496 = vmatpush.bf16.msra.mxu0 0
    %497 = vmatpush.bf16.msra.mxu0 0
    %498 = vmatpush.bf16.msra.mxu0 %v238
    %499 = vmatpush.bf16.msra.mxu0 %v237
    %500 = vmatmul.bf16.gmra.mxu0 %v487
    %v501 = vpop.f32.mrf.mxu0
    %v502 = vadd.f32 0.0, %v501
    %v503 = vpop.f32.mrf.mxu0
    %v504 = vadd.f32 0.0, %v503
    %505 = vmatmul.bf16.gmra.mxu0 %v490
    %v506 = vpop.f32.mrf.mxu0
    %v507 = vadd.f32 0.0, %v506
    %v508 = vpop.f32.mrf.mxu0
    %v509 = vadd.f32 0.0, %v508
    %510 = vdwg.mxu0
    %v515 = vunpack.c.l.b16 %v211
    %v516 = vunpack.c.l.b16 %v212
    %v517 = vunpack.c.l.b16 %v213
    %v518 = vunpack.c.l.b16 %v214
    %v519 = vpack.c.b16 %v516, %v515
    %v520 = vpack.c.b16 %v518, %v517
    %v522 = vsel %vm130, %v519, 0
    %v525 = vsel %vm130, %v520, 0
    %527 = vmatpush.bf16.msra.mxu0 0
    %528 = vmatpush.bf16.msra.mxu0 0
    %529 = vmatpush.bf16.msra.mxu0 0
    %530 = vmatpush.bf16.msra.mxu0 0
    %531 = vmatpush.bf16.msra.mxu0 0
    %532 = vmatpush.bf16.msra.mxu0 0
    %533 = vmatpush.bf16.msra.mxu0 %v238
    %534 = vmatpush.bf16.msra.mxu0 %v237
    %535 = vmatmul.bf16.gmra.mxu0 %v522
    %v536 = vpop.f32.mrf.mxu0
    %v537 = vadd.f32 0.0, %v536
    %v538 = vpop.f32.mrf.mxu0
    %v539 = vadd.f32 0.0, %v538
    %540 = vmatmul.bf16.gmra.mxu0 %v525
    %v541 = vpop.f32.mrf.mxu0
    %v542 = vadd.f32 0.0, %v541
    %v543 = vpop.f32.mrf.mxu0
    %v544 = vadd.f32 0.0, %v543
    %545 = vdwg.mxu0
    %v550 = vunpack.c.l.b16 %v215
    %v551 = vunpack.c.l.b16 %v216
    %v552 = vunpack.c.l.b16 %v217
    %v553 = vunpack.c.l.b16 %v218
    %v554 = vpack.c.b16 %v551, %v550
    %v555 = vpack.c.b16 %v553, %v552
    %v557 = vsel %vm130, %v554, 0
    %v560 = vsel %vm130, %v555, 0
    %562 = vmatpush.bf16.msra.mxu0 0
    %563 = vmatpush.bf16.msra.mxu0 0
    %564 = vmatpush.bf16.msra.mxu0 0
    %565 = vmatpush.bf16.msra.mxu0 0
    %566 = vmatpush.bf16.msra.mxu0 0
    %567 = vmatpush.bf16.msra.mxu0 0
    %568 = vmatpush.bf16.msra.mxu0 %v238
    %569 = vmatpush.bf16.msra.mxu0 %v237
    %570 = vmatmul.bf16.gmra.mxu0 %v557
    %v571 = vpop.f32.mrf.mxu0
    %v572 = vadd.f32 0.0, %v571
    %v573 = vpop.f32.mrf.mxu0
    %v574 = vadd.f32 0.0, %v573
    %575 = vmatmul.bf16.gmra.mxu0 %v560
    %v576 = vpop.f32.mrf.mxu0
    %v577 = vadd.f32 0.0, %v576
    %v578 = vpop.f32.mrf.mxu0
    %v579 = vadd.f32 0.0, %v578
    %580 = vdwg.mxu0
    %v581 = vpack.c.bf16 %v257, %v257
    %v582 = vpack.c.bf16 %v259, %v259
    %v583 = vpack.c.bf16 %v262, %v262
    %v584 = vpack.c.bf16 %v264, %v264
    %v585 = vpack.c.bf16 %v292, %v292
    %v586 = vpack.c.bf16 %v294, %v294
    %v587 = vpack.c.bf16 %v297, %v297
    %v588 = vpack.c.bf16 %v299, %v299
    %v589 = vpack.c.bf16 %v327, %v327
    %v590 = vpack.c.bf16 %v329, %v329
    %v591 = vpack.c.bf16 %v332, %v332
    %v592 = vpack.c.bf16 %v334, %v334
    %v593 = vpack.c.bf16 %v362, %v362
    %v594 = vpack.c.bf16 %v364, %v364
    %v595 = vpack.c.bf16 %v367, %v367
    %v596 = vpack.c.bf16 %v369, %v369
    %v597 = vpack.c.bf16 %v397, %v397
    %v598 = vpack.c.bf16 %v399, %v399
    %v599 = vpack.c.bf16 %v402, %v402
    %v600 = vpack.c.bf16 %v404, %v404
    %v601 = vpack.c.bf16 %v432, %v432
    %v602 = vpack.c.bf16 %v434, %v434
    %v603 = vpack.c.bf16 %v437, %v437
    %v604 = vpack.c.bf16 %v439, %v439
    %v605 = vpack.c.bf16 %v467, %v467
    %v606 = vpack.c.bf16 %v469, %v469
    %v607 = vpack.c.bf16 %v472, %v472
    %v608 = vpack.c.bf16 %v474, %v474
    %v609 = vpack.c.bf16 %v502, %v502
    %v610 = vpack.c.bf16 %v504, %v504
    %v611 = vpack.c.bf16 %v507, %v507
    %v612 = vpack.c.bf16 %v509, %v509
    %v613 = vpack.c.bf16 %v537, %v537
    %v614 = vpack.c.bf16 %v539, %v539
    %v615 = vpack.c.bf16 %v542, %v542
    %v616 = vpack.c.bf16 %v544, %v544
    %v617 = vpack.c.bf16 %v572, %v572
    %v618 = vpack.c.bf16 %v574, %v574
    %v619 = vpack.c.bf16 %v577, %v577
    %v620 = vpack.c.bf16 %v579, %v579
    %v624 = vunpack.c.l.b16 %v71
    %v625 = vunpack.c.l.b16 %v72
    %v626 = vunpack.c.l.b16 %v73
    %v627 = vpack.c.b16 %v625, %v624
    %v628 = vpack.c.b16 %v626, %v626
    %v633 = vunpack.c.l.b16 %v581
    %v634 = vunpack.c.l.b16 %v582
    %v635 = vunpack.c.l.b16 %v583
    %v636 = vunpack.c.l.b16 %v584
    %v637 = vpack.c.b16 %v634, %v633
    %v638 = vpack.c.b16 %v636, %v635
    %v642 = vsel %vm130, %v627, 0
    %v645 = vsel %vm130, %v628, 0
    %647 = vmatpush.bf16.msra.mxu0 0
    %648 = vmatpush.bf16.msra.mxu0 0
    %649 = vmatpush.bf16.msra.mxu0 0
    %650 = vmatpush.bf16.msra.mxu0 0
    %651 = vmatpush.bf16.msra.mxu0 0
    %652 = vmatpush.bf16.msra.mxu0 0
    %653 = vmatpush.bf16.msra.mxu0 %v638
    %654 = vmatpush.bf16.msra.mxu0 %v637
    %655 = vmatmul.bf16.gmra.mxu0 %v642
    %v656 = vpop.f32.mrf.mxu0
    %v657 = vadd.f32 0.0, %v656
    %v658 = vpop.f32.mrf.mxu0
    %v659 = vadd.f32 0.0, %v658
    %660 = vmatmul.bf16.gmra.mxu0 %v645
    %v661 = vpop.f32.mrf.mxu0
    %v662 = vadd.f32 0.0, %v661
    %v663 = vpop.f32.mrf.mxu0
    %664 = vdwg.mxu0
    %v669 = vunpack.c.l.b16 %v585
    %v670 = vunpack.c.l.b16 %v586
    %v671 = vunpack.c.l.b16 %v587
    %v672 = vunpack.c.l.b16 %v588
    %v673 = vpack.c.b16 %v670, %v669
    %v674 = vpack.c.b16 %v672, %v671
    %677 = vmatpush.bf16.msra.mxu0 0
    %678 = vmatpush.bf16.msra.mxu0 0
    %679 = vmatpush.bf16.msra.mxu0 0
    %680 = vmatpush.bf16.msra.mxu0 0
    %681 = vmatpush.bf16.msra.mxu0 0
    %682 = vmatpush.bf16.msra.mxu0 0
    %683 = vmatpush.bf16.msra.mxu0 %v674
    %684 = vmatpush.bf16.msra.mxu0 %v673
    %685 = vmatmul.bf16.gmra.mxu0 %v642
    %v686 = vpop.f32.mrf.mxu0
    %v687 = vadd.f32 0.0, %v686
    %v688 = vpop.f32.mrf.mxu0
    %v689 = vadd.f32 0.0, %v688
    %690 = vmatmul.bf16.gmra.mxu0 %v645
    %v691 = vpop.f32.mrf.mxu0
    %v692 = vadd.f32 0.0, %v691
    %v693 = vpop.f32.mrf.mxu0
    %694 = vdwg.mxu0
    %v699 = vunpack.c.l.b16 %v589
    %v700 = vunpack.c.l.b16 %v590
    %v701 = vunpack.c.l.b16 %v591
    %v702 = vunpack.c.l.b16 %v592
    %v703 = vpack.c.b16 %v700, %v699
    %v704 = vpack.c.b16 %v702, %v701
    %707 = vmatpush.bf16.msra.mxu0 0
    %708 = vmatpush.bf16.msra.mxu0 0
    %709 = vmatpush.bf16.msra.mxu0 0
    %710 = vmatpush.bf16.msra.mxu0 0
    %711 = vmatpush.bf16.msra.mxu0 0
    %712 = vmatpush.bf16.msra.mxu0 0
    %713 = vmatpush.bf16.msra.mxu0 %v704
    %714 = vmatpush.bf16.msra.mxu0 %v703
    %715 = vmatmul.bf16.gmra.mxu0 %v642
    %v716 = vpop.f32.mrf.mxu0
    %v717 = vadd.f32 0.0, %v716
    %v718 = vpop.f32.mrf.mxu0
    %v719 = vadd.f32 0.0, %v718
    %720 = vmatmul.bf16.gmra.mxu0 %v645
    %v721 = vpop.f32.mrf.mxu0
    %v722 = vadd.f32 0.0, %v721
    %v723 = vpop.f32.mrf.mxu0
    %724 = vdwg.mxu0
    %v729 = vunpack.c.l.b16 %v593
    %v730 = vunpack.c.l.b16 %v594
    %v731 = vunpack.c.l.b16 %v595
    %v732 = vunpack.c.l.b16 %v596
    %v733 = vpack.c.b16 %v730, %v729
    %v734 = vpack.c.b16 %v732, %v731
    %737 = vmatpush.bf16.msra.mxu0 0
    %738 = vmatpush.bf16.msra.mxu0 0
    %739 = vmatpush.bf16.msra.mxu0 0
    %740 = vmatpush.bf16.msra.mxu0 0
    %741 = vmatpush.bf16.msra.mxu0 0
    %742 = vmatpush.bf16.msra.mxu0 0
    %743 = vmatpush.bf16.msra.mxu0 %v734
    %744 = vmatpush.bf16.msra.mxu0 %v733
    %745 = vmatmul.bf16.gmra.mxu0 %v642
    %v746 = vpop.f32.mrf.mxu0
    %v747 = vadd.f32 0.0, %v746
    %v748 = vpop.f32.mrf.mxu0
    %v749 = vadd.f32 0.0, %v748
    %750 = vmatmul.bf16.gmra.mxu0 %v645
    %v751 = vpop.f32.mrf.mxu0
    %v752 = vadd.f32 0.0, %v751
    %v753 = vpop.f32.mrf.mxu0
    %754 = vdwg.mxu0
    %v759 = vunpack.c.l.b16 %v597
    %v760 = vunpack.c.l.b16 %v598
    %v761 = vunpack.c.l.b16 %v599
    %v762 = vunpack.c.l.b16 %v600
    %v763 = vpack.c.b16 %v760, %v759
    %v764 = vpack.c.b16 %v762, %v761
    %767 = vmatpush.bf16.msra.mxu0 0
    %768 = vmatpush.bf16.msra.mxu0 0
    %769 = vmatpush.bf16.msra.mxu0 0
    %770 = vmatpush.bf16.msra.mxu0 0
    %771 = vmatpush.bf16.msra.mxu0 0
    %772 = vmatpush.bf16.msra.mxu0 0
    %773 = vmatpush.bf16.msra.mxu0 %v764
    %774 = vmatpush.bf16.msra.mxu0 %v763
    %775 = vmatmul.bf16.gmra.mxu0 %v642
    %v776 = vpop.f32.mrf.mxu0
    %v777 = vadd.f32 0.0, %v776
    %v778 = vpop.f32.mrf.mxu0
    %v779 = vadd.f32 0.0, %v778
    %780 = vmatmul.bf16.gmra.mxu0 %v645
    %v781 = vpop.f32.mrf.mxu0
    %v782 = vadd.f32 0.0, %v781
    %v783 = vpop.f32.mrf.mxu0
    %784 = vdwg.mxu0
    %v789 = vunpack.c.l.b16 %v601
    %v790 = vunpack.c.l.b16 %v602
    %v791 = vunpack.c.l.b16 %v603
    %v792 = vunpack.c.l.b16 %v604
    %v793 = vpack.c.b16 %v790, %v789
    %v794 = vpack.c.b16 %v792, %v791
    %797 = vmatpush.bf16.msra.mxu0 0
    %798 = vmatpush.bf16.msra.mxu0 0
    %799 = vmatpush.bf16.msra.mxu0 0
    %800 = vmatpush.bf16.msra.mxu0 0
    %801 = vmatpush.bf16.msra.mxu0 0
    %802 = vmatpush.bf16.msra.mxu0 0
    %803 = vmatpush.bf16.msra.mxu0 %v794
    %804 = vmatpush.bf16.msra.mxu0 %v793
    %805 = vmatmul.bf16.gmra.mxu0 %v642
    %v806 = vpop.f32.mrf.mxu0
    %v807 = vadd.f32 0.0, %v806
    %v808 = vpop.f32.mrf.mxu0
    %v809 = vadd.f32 0.0, %v808
    %810 = vmatmul.bf16.gmra.mxu0 %v645
    %v811 = vpop.f32.mrf.mxu0
    %v812 = vadd.f32 0.0, %v811
    %v813 = vpop.f32.mrf.mxu0
    %814 = vdwg.mxu0
    %v819 = vunpack.c.l.b16 %v605
    %v820 = vunpack.c.l.b16 %v606
    %v821 = vunpack.c.l.b16 %v607
    %v822 = vunpack.c.l.b16 %v608
    %v823 = vpack.c.b16 %v820, %v819
    %v824 = vpack.c.b16 %v822, %v821
    %827 = vmatpush.bf16.msra.mxu0 0
    %828 = vmatpush.bf16.msra.mxu0 0
    %829 = vmatpush.bf16.msra.mxu0 0
    %830 = vmatpush.bf16.msra.mxu0 0
    %831 = vmatpush.bf16.msra.mxu0 0
    %832 = vmatpush.bf16.msra.mxu0 0
    %833 = vmatpush.bf16.msra.mxu0 %v824
    %834 = vmatpush.bf16.msra.mxu0 %v823
    %835 = vmatmul.bf16.gmra.mxu0 %v642
    %v836 = vpop.f32.mrf.mxu0
    %v837 = vadd.f32 0.0, %v836
    %v838 = vpop.f32.mrf.mxu0
    %v839 = vadd.f32 0.0, %v838
    %840 = vmatmul.bf16.gmra.mxu0 %v645
    %v841 = vpop.f32.mrf.mxu0
    %v842 = vadd.f32 0.0, %v841
    %v843 = vpop.f32.mrf.mxu0
    %844 = vdwg.mxu0
    %v849 = vunpack.c.l.b16 %v609
    %v850 = vunpack.c.l.b16 %v610
    %v851 = vunpack.c.l.b16 %v611
    %v852 = vunpack.c.l.b16 %v612
    %v853 = vpack.c.b16 %v850, %v849
    %v854 = vpack.c.b16 %v852, %v851
    %857 = vmatpush.bf16.msra.mxu0 0
    %858 = vmatpush.bf16.msra.mxu0 0
    %859 = vmatpush.bf16.msra.mxu0 0
    %860 = vmatpush.bf16.msra.mxu0 0
    %861 = vmatpush.bf16.msra.mxu0 0
    %862 = vmatpush.bf16.msra.mxu0 0
    %863 = vmatpush.bf16.msra.mxu0 %v854
    %864 = vmatpush.bf16.msra.mxu0 %v853
    %865 = vmatmul.bf16.gmra.mxu0 %v642
    %v866 = vpop.f32.mrf.mxu0
    %v867 = vadd.f32 0.0, %v866
    %v868 = vpop.f32.mrf.mxu0
    %v869 = vadd.f32 0.0, %v868
    %870 = vmatmul.bf16.gmra.mxu0 %v645
    %v871 = vpop.f32.mrf.mxu0
    %v872 = vadd.f32 0.0, %v871
    %v873 = vpop.f32.mrf.mxu0
    %874 = vdwg.mxu0
    %v879 = vunpack.c.l.b16 %v613
    %v880 = vunpack.c.l.b16 %v614
    %v881 = vunpack.c.l.b16 %v615
    %v882 = vunpack.c.l.b16 %v616
    %v883 = vpack.c.b16 %v880, %v879
    %v884 = vpack.c.b16 %v882, %v881
    %887 = vmatpush.bf16.msra.mxu0 0
    %888 = vmatpush.bf16.msra.mxu0 0
    %889 = vmatpush.bf16.msra.mxu0 0
    %890 = vmatpush.bf16.msra.mxu0 0
    %891 = vmatpush.bf16.msra.mxu0 0
    %892 = vmatpush.bf16.msra.mxu0 0
    %893 = vmatpush.bf16.msra.mxu0 %v884
    %894 = vmatpush.bf16.msra.mxu0 %v883
    %895 = vmatmul.bf16.gmra.mxu0 %v642
    %v896 = vpop.f32.mrf.mxu0
    %v897 = vadd.f32 0.0, %v896
    %v898 = vpop.f32.mrf.mxu0
    %v899 = vadd.f32 0.0, %v898
    %900 = vmatmul.bf16.gmra.mxu0 %v645
    %v901 = vpop.f32.mrf.mxu0
    %v902 = vadd.f32 0.0, %v901
    %v903 = vpop.f32.mrf.mxu0
    %904 = vdwg.mxu0
    %v909 = vunpack.c.l.b16 %v617
    %v910 = vunpack.c.l.b16 %v618
    %v911 = vunpack.c.l.b16 %v619
    %v912 = vunpack.c.l.b16 %v620
    %v913 = vpack.c.b16 %v910, %v909
    %v914 = vpack.c.b16 %v912, %v911
    %917 = vmatpush.bf16.msra.mxu0 0
    %918 = vmatpush.bf16.msra.mxu0 0
    %919 = vmatpush.bf16.msra.mxu0 0
    %920 = vmatpush.bf16.msra.mxu0 0
    %921 = vmatpush.bf16.msra.mxu0 0
    %922 = vmatpush.bf16.msra.mxu0 0
    %923 = vmatpush.bf16.msra.mxu0 %v914
    %924 = vmatpush.bf16.msra.mxu0 %v913
    %925 = vmatmul.bf16.gmra.mxu0 %v642
    %v926 = vpop.f32.mrf.mxu0
    %v927 = vadd.f32 0.0, %v926
    %v928 = vpop.f32.mrf.mxu0
    %v929 = vadd.f32 0.0, %v928
    %930 = vmatmul.bf16.gmra.mxu0 %v645
    %v931 = vpop.f32.mrf.mxu0
    %v932 = vadd.f32 0.0, %v931
    %v933 = vpop.f32.mrf.mxu0
    %934 = vdwg.mxu0
    %v935 = vmul.f32 %v657, %v657
    %v936 = vmul.f32 %v659, %v659
    %v937 = vmul.f32 %v662, %v662
    %v938 = vmul.f32 %v687, %v687
    %v939 = vmul.f32 %v689, %v689
    %v940 = vmul.f32 %v692, %v692
    %v941 = vmul.f32 %v717, %v717
    %v942 = vmul.f32 %v719, %v719
    %v943 = vmul.f32 %v722, %v722
    %v944 = vmul.f32 %v747, %v747
    %v945 = vmul.f32 %v749, %v749
    %v946 = vmul.f32 %v752, %v752
    %v947 = vmul.f32 %v657, %v717
    %v948 = vmul.f32 %v659, %v719
    %v949 = vmul.f32 %v662, %v722
    %v950 = vmul.f32 %v687, %v747
    %v951 = vmul.f32 %v689, %v749
    %v952 = vmul.f32 %v692, %v752
    %v953 = vsub.f32 %v777, %v935
    %v954 = vsub.f32 %v779, %v936
    %v955 = vsub.f32 %v782, %v937
    %v956 = vsub.f32 %v807, %v938
    %v957 = vsub.f32 %v809, %v939
    %v958 = vsub.f32 %v812, %v940
    %v959 = vsub.f32 %v837, %v941
    %v960 = vsub.f32 %v839, %v942
    %v961 = vsub.f32 %v842, %v943
    %v962 = vsub.f32 %v867, %v944
    %v963 = vsub.f32 %v869, %v945
    %v964 = vsub.f32 %v872, %v946
    %v965 = vsub.f32 %v897, %v947
    %v966 = vsub.f32 %v899, %v948
    %v967 = vsub.f32 %v902, %v949
    %v968 = vsub.f32 %v927, %v950
    %v969 = vsub.f32 %v929, %v951
    %v970 = vsub.f32 %v932, %v952
    %v971 = vmul.f32 %v947, 2.0
    %v972 = vmul.f32 %v948, 2.0
    %v973 = vmul.f32 %v949, 2.0
    %v974 = vmul.f32 %v950, 2.0
    %v975 = vmul.f32 %v951, 2.0
    %v976 = vmul.f32 %v952, 2.0
    %v977 = vadd.f32 %v971, 0.0001
    %v978 = vadd.f32 %v972, 0.0001
    %v979 = vadd.f32 %v973, 0.0001
    %v980 = vadd.f32 %v974, 0.0001
    %v981 = vadd.f32 %v975, 0.0001
    %v982 = vadd.f32 %v976, 0.0001
    %v983 = vmul.f32 %v965, 2.0
    %v984 = vmul.f32 %v966, 2.0
    %v985 = vmul.f32 %v967, 2.0
    %v986 = vmul.f32 %v968, 2.0
    %v987 = vmul.f32 %v969, 2.0
    %v988 = vmul.f32 %v970, 2.0
    %v989 = vadd.f32 %v983, 0.0009
    %v990 = vadd.f32 %v984, 0.0009
    %v991 = vadd.f32 %v985, 0.0009
    %v992 = vadd.f32 %v986, 0.0009
    %v993 = vadd.f32 %v987, 0.0009
    %v994 = vadd.f32 %v988, 0.0009
    %v995 = vmul.f32 %v977, %v989
    %v996 = vmul.f32 %v978, %v990
    %v997 = vmul.f32 %v979, %v991
    %v998 = vmul.f32 %v980, %v992
    %v999 = vmul.f32 %v981, %v993
    %v1000 = vmul.f32 %v982, %v994
    %v1001 = vadd.f32 %v935, %v941
    %v1002 = vadd.f32 %v936, %v942
    %v1003 = vadd.f32 %v937, %v943
    %v1004 = vadd.f32 %v938, %v944
    %v1005 = vadd.f32 %v939, %v945
    %v1006 = vadd.f32 %v940, %v946
    %v1007 = vadd.f32 %v1001, 0.0001
    %v1008 = vadd.f32 %v1002, 0.0001
    %v1009 = vadd.f32 %v1003, 0.0001
    %v1010 = vadd.f32 %v1004, 0.0001
    %v1011 = vadd.f32 %v1005, 0.0001
    %v1012 = vadd.f32 %v1006, 0.0001
    %v1013 = vadd.f32 %v953, %v959
    %v1014 = vadd.f32 %v954, %v960
    %v1015 = vadd.f32 %v955, %v961
    %v1016 = vadd.f32 %v956, %v962
    %v1017 = vadd.f32 %v957, %v963
    %v1018 = vadd.f32 %v958, %v964
    %v1019 = vadd.f32 %v1013, 0.0009
    %v1020 = vadd.f32 %v1014, 0.0009
    %v1021 = vadd.f32 %v1015, 0.0009
    %v1022 = vadd.f32 %v1016, 0.0009
    %v1023 = vadd.f32 %v1017, 0.0009
    %v1024 = vadd.f32 %v1018, 0.0009
    %v1025 = vmul.f32 %v1007, %v1019
    %v1026 = vmul.f32 %v1008, %v1020
    %v1027 = vmul.f32 %v1009, %v1021
    %v1028 = vmul.f32 %v1010, %v1022
    %v1029 = vmul.f32 %v1011, %v1023
    %v1030 = vmul.f32 %v1012, %v1024
    %v1031 = vrcp.pop %v1025
    %v1032 = vmul.f32 %v1025, %v1031
    %v1033 = vsub.f32 1.0, %v1032
    %v1034 = vmul.f32 %v1031, %v1033
    %v1035 = vadd.f32 %v1031, %v1034
    %vm1036 = vweird.f32 %v1025
    %vm1037 = vweird.f32 %v1031
    %vm1038 = vmor %vm1036, %vm1037
    %v1039 = vsel %vm1038, %v1031, %v1035
    %v1040 = vand.u32 2147483647, %v1025
    %vm1041 = vcmp.eq.f32.partialorder %v1040, 8.507059e+37
    %v1042 = vand.u32 %v1025, 2147483648
    %v1043 = vor.u32 1.1754944e-38, %v1042
    %v1044 = vsel %vm1041, %v1043, %v1039
    %v1045 = vmul.f32 %v995, %v1044
    %v1046 = vrcp.pop %v1026
    %v1047 = vmul.f32 %v1026, %v1046
    %v1048 = vsub.f32 1.0, %v1047
    %v1049 = vmul.f32 %v1046, %v1048
    %v1050 = vadd.f32 %v1046, %v1049
    %vm1051 = vweird.f32 %v1026
    %vm1052 = vweird.f32 %v1046
    %vm1053 = vmor %vm1051, %vm1052
    %v1054 = vsel %vm1053, %v1046, %v1050
    %v1055 = vand.u32 2147483647, %v1026
    %vm1056 = vcmp.eq.f32.partialorder %v1055, 8.507059e+37
    %v1057 = vand.u32 %v1026, 2147483648
    %v1058 = vor.u32 1.1754944e-38, %v1057
    %v1059 = vsel %vm1056, %v1058, %v1054
    %v1060 = vmul.f32 %v996, %v1059
    %v1061 = vrcp.pop %v1027
    %v1062 = vmul.f32 %v1027, %v1061
    %v1063 = vsub.f32 1.0, %v1062
    %v1064 = vmul.f32 %v1061, %v1063
    %v1065 = vadd.f32 %v1061, %v1064
    %vm1066 = vweird.f32 %v1027
    %vm1067 = vweird.f32 %v1061
    %vm1068 = vmor %vm1066, %vm1067
    %v1069 = vsel %vm1068, %v1061, %v1065
    %v1070 = vand.u32 2147483647, %v1027
    %vm1071 = vcmp.eq.f32.partialorder %v1070, 8.507059e+37
    %v1072 = vand.u32 %v1027, 2147483648
    %v1073 = vor.u32 1.1754944e-38, %v1072
    %v1074 = vsel %vm1071, %v1073, %v1069
    %v1075 = vmul.f32 %v997, %v1074
    %v1076 = vrcp.pop %v1028
    %v1077 = vmul.f32 %v1028, %v1076
    %v1078 = vsub.f32 1.0, %v1077
    %v1079 = vmul.f32 %v1076, %v1078
    %v1080 = vadd.f32 %v1076, %v1079
    %vm1081 = vweird.f32 %v1028
    %vm1082 = vweird.f32 %v1076
    %vm1083 = vmor %vm1081, %vm1082
    %v1084 = vsel %vm1083, %v1076, %v1080
    %v1085 = vand.u32 2147483647, %v1028
    %vm1086 = vcmp.eq.f32.partialorder %v1085, 8.507059e+37
    %v1087 = vand.u32 %v1028, 2147483648
    %v1088 = vor.u32 1.1754944e-38, %v1087
    %v1089 = vsel %vm1086, %v1088, %v1084
    %v1090 = vmul.f32 %v998, %v1089
    %v1091 = vrcp.pop %v1029
    %v1092 = vmul.f32 %v1029, %v1091
    %v1093 = vsub.f32 1.0, %v1092
    %v1094 = vmul.f32 %v1091, %v1093
    %v1095 = vadd.f32 %v1091, %v1094
    %vm1096 = vweird.f32 %v1029
    %vm1097 = vweird.f32 %v1091
    %vm1098 = vmor %vm1096, %vm1097
    %v1099 = vsel %vm1098, %v1091, %v1095
    %v1100 = vand.u32 2147483647, %v1029
    %vm1101 = vcmp.eq.f32.partialorder %v1100, 8.507059e+37
    %v1102 = vand.u32 %v1029, 2147483648
    %v1103 = vor.u32 1.1754944e-38, %v1102
    %v1104 = vsel %vm1101, %v1103, %v1099
    %v1105 = vmul.f32 %v999, %v1104
    %v1106 = vrcp.pop %v1030
    %v1107 = vmul.f32 %v1030, %v1106
    %v1108 = vsub.f32 1.0, %v1107
    %v1109 = vmul.f32 %v1106, %v1108
    %v1110 = vadd.f32 %v1106, %v1109
    %vm1111 = vweird.f32 %v1030
    %vm1112 = vweird.f32 %v1106
    %vm1113 = vmor %vm1111, %vm1112
    %v1114 = vsel %vm1113, %v1106, %v1110
    %v1115 = vand.u32 2147483647, %v1030
    %vm1116 = vcmp.eq.f32.partialorder %v1115, 8.507059e+37
    %v1117 = vand.u32 %v1030, 2147483648
    %v1118 = vor.u32 1.1754944e-38, %v1117
    %v1119 = vsel %vm1116, %v1118, %v1114
    %v1120 = vmul.f32 %v1000, %v1119
    %vm1121 = vcmask 179200
    %v1122 = vsel %vm1121, %v1045, 0.0
    %v1123 = vsel %vm1121, %v1060, 0.0
    %v1124 = vadd.f32 %v1122, %v1123
    %vm1125 = vcmask 177152
    %v1126 = vsel %vm1125, %v1075, 0.0
    %v1127 = vadd.f32 %v1124, %v1126
    %v1128 = vsel %vm1121, %v1090, 0.0
    %v1129 = vadd.f32 %v1127, %v1128
    %v1130 = vsel %vm1121, %v1105, 0.0
    %v1131 = vadd.f32 %v1129, %v1130
    %v1132 = vsel %vm1125, %v1120, 0.0
    %v1133 = vadd.f32 %v1131, %v1132
    %1134 = vadd.xlane.f32.xlu0 %v1133
    %v1135 = vpop.xlane.xlu0 %1134
    %v1136 = vrot.slane %v1135, 4
    %v1137 = vadd.f32 %v1135, %v1136
    %v1138 = vrot.slane %v1137, 2
    %v1139 = vadd.f32 %v1137, %v1138
    %v1140 = vrot.slane %v1139, 1
    %v1141 = vadd.f32 %v1139, %v1140
    %s1142 = vtos %v1141
    %v1143 = vstv %s1142
    %v1144 = vstv %s154
    %vm1145 = vcmask 1040384
    %v1146 = vsel %vm1145, %v1143, %v1144
    %1147 = vst [vmem:[#allocation7] sm:$0x3] %v1146
    // Predicated region
    $region26: #{tpu_custom_call.1} parent=1 // pred_check
      _
    $region27: #{tpu_custom_call.1} parent=1 // pred_check_branch
      %1149 = sbr.rel (0) target = $region29
    $region28: #{tpu_custom_call.1} parent=1 // pred_region
      %1151 = vsyncadd [#allocation4], 0
      %s1153 = sshll.u32 [#allocation7], 4
      %s1154 = int_to_ptr.vmem [resolvable:$true] %s1153
      %s1155 = sshll.u32 %s4, 4
      %s1156 = int_to_ptr.hbm [resolvable:$true] %s1155
      %1158 = dma.vmem_to_hbm [thread:$0]  %s1154, 32, %s1156, [#allocation4]
    $region29: #{tpu_custom_call.1} parent=1 // pred_fallthru
      _
    // Predicated region
    $region30: #{tpu_custom_call.1} parent=1 // pred_check
      _
    $region31: #{tpu_custom_call.1} parent=1 // pred_check_branch
      %1160 = sbr.rel (0) target = $region33
    $region32: #{tpu_custom_call.1} parent=1 // pred_region
      %1162 = dma.done [#allocation4], 32
    $region33: #{tpu_custom_call.1} parent=1 // pred_fallthru
      _
    %1163 = vsyncpa [#allocation3], 1
    %1164 = vsyncpa [#allocation6], 1
    %1165 = vsyncpa [#allocation4], 1

</llo_original>
